<compile_context>
chip_gen: v7x
topology: tpu7x:2x2x1
jax: 0.10.0
libtpu: 0.0.40
codegen_flags: <defaults>
</compile_context>

<pallas_src>
import numpy as np
import jax
import jax.numpy as jnp
from jax.experimental import pallas as pl
from jax.experimental.pallas import tpu as pltpu

_INV_SQRT2 = 0.7071067811865476


def _haar_dwt1d_kernel(xe_ref, xo_ref, lo_ref, hi_ref):
    """2-tap Haar analysis butterfly on one (g, width) tile of each stream."""
    a = xe_ref[...]   # even samples  x[..., 2i]
    b = xo_ref[...]   # odd  samples  x[..., 2i+1]
    # Native-dtype math: python-float scale is weakly typed so bf16 stays bf16
    # (free VALU/vreg slack on v6e/v7x); f32 stays f32.
    lo_ref[...] = ((a + b) * _INV_SQRT2).astype(lo_ref.dtype)
    hi_ref[...] = ((a - b) * _INV_SQRT2).astype(hi_ref.dtype)


def _pad_odd_length(x, mode):
    """Mirror _pad1d for db1: pad one sample on the right only if L is odd."""
    if x.shape[-1] % 2 == 0:
        return x
    pad = [(0, 0)] * (x.ndim - 1) + [(0, 1)]
    if mode == "zero":
        return jnp.pad(x, pad)
    if mode == "reflect":
        return jnp.pad(x, pad, mode="reflect")
    if mode == "symmetric":
        return jnp.pad(x, pad, mode="symmetric")
    if mode == "periodic":
        return jnp.pad(x, pad, mode="wrap")
    raise ValueError(f"unknown padding mode: {mode!r}")


def _sublane_multiple(itemsize):
    """Dtype-aware sublane rounding: 8 for f32, 16 for bf16, 32 for int8/fp8."""
    return max(8, 32 // max(1, itemsize))


_WIDTH_CANDIDATES = (8192, 4096, 2048, 1024, 512, 256, 128)


def _choose_layout(n, sub):
    """Pick a lane-dense (rows, width, tail_pad) 2D view of a flat length-n stream."""
    # Prefer: width multiple of 128 that divides n AND keeps rows a multiple of
    # the sublane packing (clean, fully dense tiles).
    for width in _WIDTH_CANDIDATES:
        if n % width == 0 and (n // width) % sub == 0:
            return n // width, width, 0
    # Next best: any candidate width that divides n exactly.
    for width in _WIDTH_CANDIDATES:
        if n % width == 0:
            return n // width, width, 0
    # Fallback: zero-pad the tail up to a lane-dense width (never a huge,
    # VMEM-busting width; never masked partial-lane stores).
    width = 512 if n >= 512 else 128
    n_pad = pl.cdiv(n, width) * width
    return n_pad // width, width, n_pad - n


def _pick_block_rows(rows, target_rows, sub):
    """Rows per grid step: sublane-aligned, preferably an exact divisor of rows."""
    if target_rows >= rows:
        return rows
    best = 0
    d = 1
    while d * d <= rows:
        if rows % d == 0:
            for cand in (d, rows // d):
                if cand <= target_rows and cand % sub == 0 and cand > best:
                    best = cand
        d += 1
    if best > 0:
        return best
    g = (target_rows // sub) * sub
    if g <= 0:
        g = min(rows, sub)
    return g


def _vmem_capacity_bytes():
    """Trace-time VMEM capacity query; conservative (v7x per-TC) fallback."""
    try:
        info = pltpu.get_tpu_info()
        cap = getattr(info, "vmem_capacity_bytes", None)
        if cap:
            return int(cap)
    except Exception:
        pass
    return 64 * 1024 * 1024


def dwt1d(x, wave="db1", mode="zero"):
    """1-level 1D DWT.  x: (B, C, L) -> (x_lo, x_hi), each (B, C, ceil(L/2))."""
    if wave != "db1":
        # TODO(synk): filter length > 2 needs overlapping strided windows.
        raise NotImplementedError("only wave='db1' is implemented")
    assert x.ndim == 3, "expected input of shape (B, C, L)"

    x = _pad_odd_length(x, mode)
    B, C, L = x.shape
    Lh = L // 2

    # Polyphase (even/odd) split expressed as XLA stride-2 slices; with
    # allow_input_fusion below these fuse into the kernel's input DMAs instead
    # of being written back to HBM.
    xe = x[..., 0::2].reshape(-1)
    xo = x[..., 1::2].reshape(-1)

    n = B * C * Lh
    itemsize = np.dtype(x.dtype).itemsize
    sub = _sublane_multiple(itemsize)
    rows, width, tail_pad = _choose_layout(n, sub)
    if tail_pad:
        xe = jnp.pad(xe, (0, tail_pad))
        xo = jnp.pad(xo, (0, tail_pad))
    xe2 = xe.reshape(rows, width)
    xo2 = xo.reshape(rows, width)

    # Generation-aware block sizing.  Pipeline footprint is
    # 4 streams x 2 buffers x block, kept well under vmem_limit_bytes.
    vmem_cap = _vmem_capacity_bytes()
    if vmem_cap >= 96 * 1024 * 1024:          # v5e / v6e: 128 MiB physical VMEM
        target_block_bytes = 4 << 20
        vmem_limit = 80 * 1024 * 1024
    else:                                     # v7x: 64 MiB per TensorCore
        target_block_bytes = 2 << 20
        vmem_limit = 44 * 1024 * 1024

    target_rows = max(1, target_block_bytes // (width * itemsize))
    g = _pick_block_rows(rows, target_rows, sub)
    grid = (pl.cdiv(rows, g),)

    blk = pl.BlockSpec((g, width), lambda i: (i, 0))
    out_struct = jax.ShapeDtypeStruct((rows, width), x.dtype)

    n_eff = rows * width
    cost = pl.CostEstimate(
        flops=4 * n_eff,                      # add + sub + 2 scales per pair
        transcendentals=0,
        bytes_accessed=4 * n_eff * itemsize,  # 2 streams in + 2 streams out
    )

    lo2, hi2 = pl.pallas_call(
        _haar_dwt1d_kernel,
        grid=grid,
        in_specs=[blk, blk],
        out_specs=(blk, blk),
        out_shape=(out_struct, out_struct),
        compiler_params=pltpu.CompilerParams(
            dimension_semantics=("parallel",),       # megacore sharding on v7x
            vmem_limit_bytes=vmem_limit,
            allow_input_fusion=[True, True],         # fuse stride-2 slices into DMAs
        ),
        cost_estimate=cost,
    )(xe2, xo2)

    if tail_pad:
        lo = lo2.reshape(-1)[:n].reshape(B, C, Lh)
        hi = hi2.reshape(-1)[:n].reshape(B, C, Lh)
    else:
        lo = lo2.reshape(B, C, Lh)
        hi = hi2.reshape(B, C, Lh)
    return lo, hi


if __name__ == "__main__":
    key = jax.random.PRNGKey(0)
    k1, k2 = jax.random.split(key)
    c = 1.0 / np.sqrt(2.0)
    fn = jax.jit(dwt1d)

    # Even-length input (main path).
    B, C, L = 2, 4, 16
    x = jax.random.normal(k1, (B, C, L), dtype=jnp.float32)
    lo, hi = jax.block_until_ready(fn(x))
    assert lo.shape == (B, C, L // 2), lo.shape
    assert hi.shape == (B, C, L // 2), hi.shape
    xn = np.asarray(x)
    np.testing.assert_allclose(np.asarray(lo), ((xn[..., 0::2] + xn[..., 1::2]) * c).astype(np.float32),
                               rtol=1e-5, atol=1e-6)
    np.testing.assert_allclose(np.asarray(hi), ((xn[..., 0::2] - xn[..., 1::2]) * c).astype(np.float32),
                               rtol=1e-5, atol=1e-6)

    # Odd-length input (exercises the single-sample zero pad, like the ptwt pad).
    L2 = 17
    x2 = jax.random.normal(k2, (B, C, L2), dtype=jnp.float32)
    lo2, hi2 = jax.block_until_ready(fn(x2))
    assert lo2.shape == (B, C, (L2 + 1) // 2), lo2.shape
    xp = np.concatenate([np.asarray(x2), np.zeros((B, C, 1), np.float32)], axis=-1)
    np.testing.assert_allclose(np.asarray(lo2), ((xp[..., 0::2] + xp[..., 1::2]) * c).astype(np.float32),
                               rtol=1e-5, atol=1e-6)
    np.testing.assert_allclose(np.asarray(hi2), ((xp[..., 0::2] - xp[..., 1::2]) * c).astype(np.float32),
                               rtol=1e-5, atol=1e-6)

    print("KERNEL_OK")
</pallas_src>

<mosaic_0001>
module attributes {stable_mosaic.version = 11 : i64} {
  func.func @_haar_dwt1d_kernel(%arg0: i32, %arg1: memref<1x128xf32, #tpu.memory_space<vmem>>, %arg2: memref<1x128xf32, #tpu.memory_space<vmem>>, %arg3: memref<1x128xf32, #tpu.memory_space<vmem>>, %arg4: memref<1x128xf32, #tpu.memory_space<vmem>>) attributes {dimension_semantics = [#tpu.dimension_semantics<parallel>], iteration_bounds = array<i64: 1>, scalar_prefetch = 0 : i64, scratch_operands = 0 : i64, tpu.core_type = #tpu.core_type<tc>, window_params = [{transform_indices = @transform_0, window_bounds = array<i64: 1, 128>}, {transform_indices = @transform_1, window_bounds = array<i64: 1, 128>}, {transform_indices = @transform_2, window_bounds = array<i64: 1, 128>}, {transform_indices = @transform_3, window_bounds = array<i64: 1, 128>}]} {
    %c0 = arith.constant 0 : index
    %c0_0 = arith.constant 0 : index
    %0 = vector.load %arg1[%c0, %c0_0] : memref<1x128xf32, #tpu.memory_space<vmem>>, vector<1x128xf32>
    %c0_1 = arith.constant 0 : index
    %c0_2 = arith.constant 0 : index
    %1 = vector.load %arg2[%c0_1, %c0_2] : memref<1x128xf32, #tpu.memory_space<vmem>>, vector<1x128xf32>
    %2 = arith.addf %0, %1 : vector<1x128xf32>
    %cst = arith.constant 0.707106769 : f32
    %3 = vector.broadcast %cst : f32 to vector<1x128xf32>
    %4 = arith.mulf %2, %3 : vector<1x128xf32>
    %c0_3 = arith.constant 0 : index
    %c0_4 = arith.constant 0 : index
    %5 = vector.load %arg3[%c0_3, %c0_4] : memref<1x128xf32, #tpu.memory_space<vmem>>, vector<1x128xf32>
    tpu.vector_store %arg3[%c0_3, %c0_4], %4 {strides = array<i32>} : memref<1x128xf32, #tpu.memory_space<vmem>>, vector<1x128xf32>,
    %6 = arith.subf %0, %1 : vector<1x128xf32>
    %cst_5 = arith.constant 0.707106769 : f32
    %7 = vector.broadcast %cst_5 : f32 to vector<1x128xf32>
    %8 = arith.mulf %6, %7 : vector<1x128xf32>
    %c0_6 = arith.constant 0 : index
    %c0_7 = arith.constant 0 : index
    %9 = vector.load %arg4[%c0_6, %c0_7] : memref<1x128xf32, #tpu.memory_space<vmem>>, vector<1x128xf32>
    tpu.vector_store %arg4[%c0_6, %c0_7], %8 {strides = array<i32>} : memref<1x128xf32, #tpu.memory_space<vmem>>, vector<1x128xf32>,
    return
  }
  func.func @transform_0(%arg0: i32) -> (i32, i32) {
    %c0_i32 = arith.constant 0 : i32
    %c0_i32_0 = arith.constant 0 : i32
    return %arg0, %c0_i32 : i32, i32
  }
  func.func @transform_1(%arg0: i32) -> (i32, i32) {
    %c0_i32 = arith.constant 0 : i32
    %c0_i32_0 = arith.constant 0 : i32
    return %arg0, %c0_i32 : i32, i32
  }
  func.func @transform_2(%arg0: i32) -> (i32, i32) {
    %c0_i32 = arith.constant 0 : i32
    %c0_i32_0 = arith.constant 0 : i32
    return %arg0, %c0_i32 : i32, i32
  }
  func.func @transform_3(%arg0: i32) -> (i32, i32) {
    %c0_i32 = arith.constant 0 : i32
    %c0_i32_0 = arith.constant 0 : i32
    return %arg0, %c0_i32 : i32, i32
  }
}

</mosaic_0001>

<llo_original>
// kernel: dwt1d.2
$region0: #{dwt1d.2}
  #allocation0 [shape = 'u32[]', space=smem, size = 0x4, offset = 0x4, fixed_abs, tag = 'smem constant byte address 0x4 - core index']
  #allocation1 [shape = 'u32[144,128]{1,0:T(1,128)}', space=vmem, size = 0x12000, scoped, tag = 'internal scratch']
  #allocation2 [shape = 'u32[2048]{0}', space=vmem, size = 0x2000, scoped, tag = 'scoped memory for dwt1d.2']
  #allocation3 [shape = 'u32[2048]{0}', space=vmem, size = 0x2000, scoped, tag = 'scoped memory for dwt1d.2']
  #allocation4 [shape = 'u32[2048]{0}', space=vmem, size = 0x2000, scoped, tag = 'scoped memory for dwt1d.2']
  #allocation5 [shape = 'u32[2048]{0}', space=vmem, size = 0x2000, scoped, tag = 'scoped memory for dwt1d.2']
  #allocation6 [shape = 'u32[2048]{0}', space=vmem, size = 0x2000, scoped, tag = 'scoped memory for dwt1d.2']
  #allocation7 [shape = 'u32[2048]{0}', space=vmem, size = 0x2000, scoped, tag = 'scoped memory for dwt1d.2']
  #allocation8 [shape = 'u32[2048]{0}', space=vmem, size = 0x2000, scoped, tag = 'scoped memory for dwt1d.2']
  #allocation9 [shape = 'u32[2048]{0}', space=vmem, size = 0x2000, scoped, tag = 'scoped memory for dwt1d.2']
  #allocation10 [shape = 'u32[2048]{0}', space=vmem, size = 0x2000, scoped, tag = 'scoped memory for dwt1d.2']
  #allocation11 [shape = 'u32[2048]{0}', space=vmem, size = 0x2000, scoped, tag = 'scoped memory for dwt1d.2']
  %s0 = inlined_call_operand.vmem [shape: f32[64], index: 0, kind: input, shape index: {}]
  %s1 = inlined_call_operand.<no memory space> [shape: f32[], index: 1, kind: input, shape index: {}]
  %s2 = inlined_call_operand.vmem [shape: f32[64], index: 2, kind: input, shape index: {}]
  %s3 = inlined_call_operand.vmem [shape: f32[1,128], index: 3, kind: output, shape index: {0}]
  %s4 = inlined_call_operand.vmem [shape: f32[1,128], index: 4, kind: output, shape index: {1}]
  %5 = xla_tuple %s3, %s4
  %s6 = sld [smem:[#allocation0]]
  $region26: #{dwt1d.2} parent=0
    _
  %s8 = ssub.s32 1, %s6
  %s9 = scalar_select 0, %s8, %s6
  %v10 = vstv %s1
  %v11 = vstv %s1
  $region1: #{dwt1d.2} parent=0
    #allocation12 [shape = 'u8[512]{0}', space=vmem, size = 0x400, dematerialized = true, scoped, tag = 'FusionAdapter Buffer %fusion.2 = f32[1,128]{1,0:T(1,128)} fusion(%param_2.1, %param_1.11), kind=kLoop, calls=%fused_computation.2.clone, metadata={op_name="jit(dwt1d)/reshape" stack_frame_id=11}']
    #allocation13 [shape = 'u8[512]{0}', space=vmem, size = 0x400, dematerialized = true, scoped, tag = 'FusionAdapter Buffer %fusion.1 = f32[1,128]{1,0:T(1,128)} fusion(%param_0.12, %param_1.11), kind=kLoop, calls=%fused_computation.1.clone, metadata={op_name="jit(dwt1d)/reshape" stack_frame_id=12}']
    // Predicated region
    $region2: #{dwt1d.2} parent=1 // pred_check
      _
    $region3: #{dwt1d.2} parent=1 // pred_check_branch
      %13 = sbr.rel (0) target = $region5
    $region4: #{dwt1d.2} parent=1 // pred_region
      _
    $region5: #{dwt1d.2} parent=1 // pred_fallthru
      _
    // Predicated region
    $region6: #{dwt1d.2} parent=1 // pred_check
      _
    $region7: #{dwt1d.2} parent=1 // pred_check_branch
      %15 = sbr.rel (0) target = $region9
    $region8: #{dwt1d.2} parent=1 // pred_region
      _
    $region9: #{dwt1d.2} parent=1 // pred_fallthru
      _
    %v16 = vld [vmem:[%s2] sm:$0x1]
    %v17 = vlaneseq
    %vm19 = vcmp.lt.s32.totalorder %v17, 64
    %v20 = vsel %vm19, %v16, %v10
    %22 = vst [vmem:[#allocation12] sm:$0x1] %v20
    %v23 = vld [vmem:[%s0] sm:$0x1]
    %v24 = vlaneseq
    %vm26 = vcmp.lt.s32.totalorder %v24, 64
    %v27 = vsel %vm26, %v23, %v11
    %29 = vst [vmem:[#allocation13] sm:$0x1] %v27
    %v30 = vld [vmem:[#allocation12] sm:$0x1]
    %v31 = vld [vmem:[#allocation13] sm:$0x1]
    %v32 = vadd.f32 %v30, %v31
    %v33 = vmul.f32 %v32, 0.70710677
    %34 = vst [vmem:[%s3] sm:$0x1] %v33
    %v35 = vsub.f32 %v30, %v31
    %v36 = vmul.f32 %v35, 0.70710677
    %37 = vst [vmem:[%s4] sm:$0x1] %v36
    // Predicated region
    $region10: #{dwt1d.2} parent=1 // pred_check
      _
    $region11: #{dwt1d.2} parent=1 // pred_check_branch
      %39 = sbr.rel (0) target = $region13
    $region12: #{dwt1d.2} parent=1 // pred_region
      _
    $region13: #{dwt1d.2} parent=1 // pred_fallthru
      _
    // Predicated region
    $region14: #{dwt1d.2} parent=1 // pred_check
      _
    $region15: #{dwt1d.2} parent=1 // pred_check_branch
      %41 = sbr.rel (0) target = $region17
    $region16: #{dwt1d.2} parent=1 // pred_region
      _
    $region17: #{dwt1d.2} parent=1 // pred_fallthru
      _
    // Predicated region
    $region18: #{dwt1d.2} parent=1 // pred_check
      _
    $region19: #{dwt1d.2} parent=1 // pred_check_branch
      %43 = sbr.rel (0) target = $region21
    $region20: #{dwt1d.2} parent=1 // pred_region
      _
    $region21: #{dwt1d.2} parent=1 // pred_fallthru
      _
    // Predicated region
    $region22: #{dwt1d.2} parent=1 // pred_check
      _
    $region23: #{dwt1d.2} parent=1 // pred_check_branch
      %45 = sbr.rel (0) target = $region25
    $region24: #{dwt1d.2} parent=1 // pred_region
      _
    $region25: #{dwt1d.2} parent=1 // pred_fallthru
      _

</llo_original>
